<compile_context>
chip_gen: v5e
topology: v5e:2x2
jax: 0.10.0
libtpu: 0.0.40
codegen_flags: <defaults>
</compile_context>

<pallas_src>
import functools

import jax
import jax.numpy as jnp
from jax.experimental import pallas as pl
from jax.experimental.pallas import tpu as pltpu


def _round_up(x, m):
    return ((x + m - 1) // m) * m


def _apply_activation(y, activation):
    """Pointwise activation in f32 (matches PyTorch activation_layer)."""
    if activation is None:
        return y
    a = activation.lower()
    if a == "none":
        return y
    if a == "relu":
        return jnp.maximum(y, 0.0)
    if a == "sigmoid":
        return jax.nn.sigmoid(y)
    if a == "tanh":
        return jnp.tanh(y)
    if a == "leakyrelu":
        return jnp.where(y >= 0.0, y, 0.01 * y)   # PyTorch default slope 0.01
    raise NotImplementedError(f"activation {activation} not implemented")


def _mlp_fused_kernel(x_ref, *refs, num_layers, activation):
    """Fused MLP on one (TILE_N, H_in) row tile.

    refs = (w0, b0, w1, b1, ..., w_{L-1}, b_{L-1}, o_ref)
    All weights are VMEM-resident; intermediates stay in vregs/VMEM.
    """
    o_ref = refs[-1]
    h = x_ref[...].astype(jnp.float32)
    for l in range(num_layers):
        w = refs[2 * l][...].astype(jnp.float32)
        b = refs[2 * l + 1][...].astype(jnp.float32)          # (1, H_out_pad) broadcast
        h = jnp.dot(h, w, preferred_element_type=jnp.float32) + b
        h = _apply_activation(h, activation)
    o_ref[...] = h.astype(o_ref.dtype)


def mlp_forward(x2d, params, activation="relu", *, tile_n=512):
    """Run the fused MLP kernel.

    x2d:    (M, H_in) activations.
    params: list of (w_pad, b_pad), w_pad: (D_in_eff, D_out_pad), b_pad: (1, D_out_pad),
            with D_out_pad a multiple of 128 (lane-dense stores).
    Returns (M, D_out_pad); caller slices off the column padding.
    """
    m, h_in = x2d.shape
    num_layers = len(params)
    out_dim_pad = params[-1][0].shape[1]
    dtype = x2d.dtype

    # Row tiling: multiple of 8 sublanes, pad M up to a whole number of tiles.
    tile_n = min(tile_n, _round_up(max(m, 1), 8))
    m_pad = _round_up(m, tile_n)
    if m_pad != m:
        x2d = jnp.pad(x2d, ((0, m_pad - m), (0, 0)))
    grid = (m_pad // tile_n,)

    in_specs = [pl.BlockSpec((tile_n, h_in), lambda i: (i, 0))]
    flat_params = []
    for (w, b) in params:
        in_specs.append(pl.BlockSpec(w.shape, lambda i: (0, 0)))   # weights resident
        in_specs.append(pl.BlockSpec(b.shape, lambda i: (0, 0)))
        flat_params += [w, b]

    # Advisory cost estimate for XLA's scheduler.
    flops = 0
    transcendentals = 0
    bytes_accessed = int(x2d.size) * x2d.dtype.itemsize
    for (w, b) in params:
        flops += 2 * m_pad * w.shape[0] * w.shape[1]
        bytes_accessed += int(w.size) * w.dtype.itemsize + int(b.size) * b.dtype.itemsize
        if isinstance(activation, str) and activation.lower() in ("sigmoid", "tanh"):
            transcendentals += m_pad * w.shape[1]
    bytes_accessed += m_pad * out_dim_pad * x2d.dtype.itemsize

    kernel = functools.partial(
        _mlp_fused_kernel, num_layers=num_layers, activation=activation)

    out = pl.pallas_call(
        kernel,
        out_shape=jax.ShapeDtypeStruct((m_pad, out_dim_pad), dtype),
        grid=grid,
        in_specs=in_specs,
        out_specs=pl.BlockSpec((tile_n, out_dim_pad), lambda i: (i, 0)),
        compiler_params=pltpu.CompilerParams(
            dimension_semantics=("parallel",)),          # row tiles are independent
        cost_estimate=pl.CostEstimate(
            flops=int(flops),
            transcendentals=int(transcendentals),
            bytes_accessed=int(bytes_accessed)),
    )(x2d, *flat_params)
    return out[:m]


class MLPLayersPallas:
    """JAX/Pallas equivalent of the PyTorch MLPLayers module (forward pass).

    For each (in, out) pair in `layers`: Dropout (eval-mode identity) ->
    Linear -> activation.  Weights are stored transposed (H_in, H_out) and
    zero-padded to lane-dense widths; padding never affects the math because
    padded weight rows are zero and padded output columns are sliced away.
    """

    def __init__(self, layers, dropout=0.0, activation="relu", bn=False,
                 init_method=None, key=None, dtype=jnp.float32, tile_n=512):
        assert not bn, "bn=False only (default)"
        # TODO(synk): dropout is eval-mode identity (no RNG masking); BatchNorm not supported.
        self.layers = list(layers)
        self.activation = activation
        self.dtype = dtype          # set to jnp.bfloat16 on v6e/v7x for ~2x HBM traffic cut
        self.tile_n = tile_n
        self.out_dim = self.layers[-1]
        if key is None:
            key = jax.random.PRNGKey(0)

        self.raw_params = []   # unpadded f32, for reference checking
        self.params = []       # padded, lane-dense, stored in self.dtype
        prev_eff = self.layers[0]       # x feature axis is not padded (full-array block)
        for (h_in, h_out) in zip(self.layers[:-1], self.layers[1:]):
            key, wk, bk = jax.random.split(key, 3)
            if init_method == "norm":
                w = 0.01 * jax.random.normal(wk, (h_in, h_out), jnp.float32)
                b = jnp.zeros((1, h_out), jnp.float32)
            else:
                # PyTorch default Linear init: U(-1/sqrt(fan_in), 1/sqrt(fan_in))
                bound = 1.0 / float(h_in) ** 0.5
                w = jax.random.uniform(wk, (h_in, h_out), jnp.float32,
                                       minval=-bound, maxval=bound)
                b = jax.random.uniform(bk, (1, h_out), jnp.float32,
                                       minval=-bound, maxval=bound)
            self.raw_params.append((w, b))

            h_out_pad = _round_up(h_out, 128)
            w_pad = jnp.zeros((prev_eff, h_out_pad), jnp.float32)
            w_pad = w_pad.at[:h_in, :h_out].set(w)
            b_pad = jnp.zeros((1, h_out_pad), jnp.float32)
            b_pad = b_pad.at[:, :h_out].set(b)
            self.params.append((w_pad.astype(dtype), b_pad.astype(dtype)))
            prev_eff = h_out_pad

    def __call__(self, x):
        # Accepts (N, *, H_in); flattens leading dims, restores after.
        orig_shape = x.shape
        h_in = orig_shape[-1]
        assert h_in == self.layers[0]
        x2 = x.reshape(-1, h_in).astype(self.dtype)
        y = mlp_forward(x2, self.params, self.activation, tile_n=self.tile_n)
        y = y[:, : self.out_dim]
        return y.reshape(orig_shape[:-1] + (self.out_dim,))


def _reference_forward(mlp, x):
    """Plain-JAX reference for correctness checking (uses unpadded f32 params)."""
    x2 = x.reshape(-1, x.shape[-1]).astype(jnp.float32)
    for (w, b) in mlp.raw_params:
        x2 = x2 @ w + b
        x2 = _apply_activation(x2, mlp.activation)
    return x2.reshape(x.shape[:-1] + (mlp.layers[-1],))


if __name__ == "__main__":
    key = jax.random.PRNGKey(0)
    k_in, k_params = jax.random.split(key)

    layers = [32, 16, 8]          # H_in=32 -> 16 -> H_out=8
    batch = 8
    x = jax.random.normal(k_in, (batch, layers[0]), jnp.float32)

    mlp = MLPLayersPallas(layers, dropout=0.0, activation="relu", key=k_params)

    out = mlp(x)
    out = jax.block_until_ready(out)

    ref = _reference_forward(mlp, x)
    assert out.shape == (batch, layers[-1]), out.shape
    assert jnp.allclose(out, ref, atol=1e-5, rtol=1e-5), "mismatch vs reference"

    print("KERNEL_OK")
</pallas_src>

<mosaic_0001>
module attributes {stable_mosaic.version = 11 : i64} {
  func.func @_mlp_fused_kernel(%arg0: i32, %arg1: memref<8x32xf32, #tpu.memory_space<vmem>>, %arg2: memref<32x128xf32, #tpu.memory_space<vmem>>, %arg3: memref<1x128xf32, #tpu.memory_space<vmem>>, %arg4: memref<128x128xf32, #tpu.memory_space<vmem>>, %arg5: memref<1x128xf32, #tpu.memory_space<vmem>>, %arg6: memref<8x128xf32, #tpu.memory_space<vmem>>) attributes {dimension_semantics = [#tpu.dimension_semantics<parallel>], iteration_bounds = array<i64: 1>, scalar_prefetch = 0 : i64, scratch_operands = 0 : i64, tpu.core_type = #tpu.core_type<tc>, window_params = [{transform_indices = @transform_0, window_bounds = array<i64: 8, 32>}, {pipeline_mode = #tpu.pipeline_mode<synchronous>, transform_indices = @transform_1, window_bounds = array<i64: 32, 128>}, {pipeline_mode = #tpu.pipeline_mode<synchronous>, transform_indices = @transform_2, window_bounds = array<i64: 1, 128>}, {pipeline_mode = #tpu.pipeline_mode<synchronous>, transform_indices = @transform_3, window_bounds = array<i64: 128, 128>}, {pipeline_mode = #tpu.pipeline_mode<synchronous>, transform_indices = @transform_4, window_bounds = array<i64: 1, 128>}, {transform_indices = @transform_5, window_bounds = array<i64: 8, 128>}]} {
    %c0 = arith.constant 0 : index
    %c0_0 = arith.constant 0 : index
    %0 = vector.load %arg1[%c0, %c0_0] : memref<8x32xf32, #tpu.memory_space<vmem>>, vector<8x32xf32>
    %c0_1 = arith.constant 0 : index
    %c0_2 = arith.constant 0 : index
    %1 = vector.load %arg2[%c0_1, %c0_2] : memref<32x128xf32, #tpu.memory_space<vmem>>, vector<32x128xf32>
    %c0_3 = arith.constant 0 : index
    %c0_4 = arith.constant 0 : index
    %2 = vector.load %arg3[%c0_3, %c0_4] : memref<1x128xf32, #tpu.memory_space<vmem>>, vector<1x128xf32>
    %cst = arith.constant dense<0.000000e+00> : vector<8x128xf32>
    %3 = tpu.matmul %0, %1, %cst {dimension_numbers = #tpu.dot_dimension_numbers<[1], [0], [0], [1], [0, 0, 1, 1], [], []>} : vector<8x32xf32>, vector<32x128xf32>, vector<8x128xf32> -> vector<8x128xf32>
    %4 = vector.broadcast %2 : vector<1x128xf32> to vector<8x128xf32>
    %5 = arith.addf %3, %4 : vector<8x128xf32>
    %cst_5 = arith.constant 0.000000e+00 : f32
    %6 = vector.broadcast %cst_5 : f32 to vector<8x128xf32>
    %7 = arith.maximumf %5, %6 : vector<8x128xf32>
    %c0_6 = arith.constant 0 : index
    %c0_7 = arith.constant 0 : index
    %8 = vector.load %arg4[%c0_6, %c0_7] : memref<128x128xf32, #tpu.memory_space<vmem>>, vector<128x128xf32>
    %c0_8 = arith.constant 0 : index
    %c0_9 = arith.constant 0 : index
    %9 = vector.load %arg5[%c0_8, %c0_9] : memref<1x128xf32, #tpu.memory_space<vmem>>, vector<1x128xf32>
    %cst_10 = arith.constant dense<0.000000e+00> : vector<8x128xf32>
    %10 = tpu.matmul %7, %8, %cst_10 {dimension_numbers = #tpu.dot_dimension_numbers<[1], [0], [0], [1], [0, 0, 1, 1], [], []>} : vector<8x128xf32>, vector<128x128xf32>, vector<8x128xf32> -> vector<8x128xf32>
    %11 = vector.broadcast %9 : vector<1x128xf32> to vector<8x128xf32>
    %12 = arith.addf %10, %11 : vector<8x128xf32>
    %cst_11 = arith.constant 0.000000e+00 : f32
    %13 = vector.broadcast %cst_11 : f32 to vector<8x128xf32>
    %14 = arith.maximumf %12, %13 : vector<8x128xf32>
    %c0_12 = arith.constant 0 : index
    %c0_13 = arith.constant 0 : index
    %15 = vector.load %arg6[%c0_12, %c0_13] : memref<8x128xf32, #tpu.memory_space<vmem>>, vector<8x128xf32>
    tpu.vector_store %arg6[%c0_12, %c0_13], %14 {strides = array<i32>} : memref<8x128xf32, #tpu.memory_space<vmem>>, vector<8x128xf32>,
    return
  }
  func.func @transform_0(%arg0: i32) -> (i32, i32) {
    %c0_i32 = arith.constant 0 : i32
    %c0_i32_0 = arith.constant 0 : i32
    return %arg0, %c0_i32 : i32, i32
  }
  func.func @transform_1(%arg0: i32) -> (i32, i32) {
    %c0_i32 = arith.constant 0 : i32
    %c0_i32_0 = arith.constant 0 : i32
    %c0_i32_1 = arith.constant 0 : i32
    return %c0_i32, %c0_i32_0 : i32, i32
  }
  func.func @transform_2(%arg0: i32) -> (i32, i32) {
    %c0_i32 = arith.constant 0 : i32
    %c0_i32_0 = arith.constant 0 : i32
    %c0_i32_1 = arith.constant 0 : i32
    return %c0_i32, %c0_i32_0 : i32, i32
  }
  func.func @transform_3(%arg0: i32) -> (i32, i32) {
    %c0_i32 = arith.constant 0 : i32
    %c0_i32_0 = arith.constant 0 : i32
    %c0_i32_1 = arith.constant 0 : i32
    return %c0_i32, %c0_i32_0 : i32, i32
  }
  func.func @transform_4(%arg0: i32) -> (i32, i32) {
    %c0_i32 = arith.constant 0 : i32
    %c0_i32_0 = arith.constant 0 : i32
    %c0_i32_1 = arith.constant 0 : i32
    return %c0_i32, %c0_i32_0 : i32, i32
  }
  func.func @transform_5(%arg0: i32) -> (i32, i32) {
    %c0_i32 = arith.constant 0 : i32
    %c0_i32_0 = arith.constant 0 : i32
    return %arg0, %c0_i32 : i32, i32
  }
}

</mosaic_0001>

<llo_original>
// kernel: tpu_custom_call.1
$region0: #{tpu_custom_call.1}
  #allocation0 [shape = 'u32[]', space=smem, size = 0x4, offset = 0x4, fixed_abs, tag = 'smem constant byte address 0x4 - core index']
  #allocation1 [shape = 'u32[72,128]{1,0:T(1,128)}', space=vmem, size = 0x9000, scoped, tag = 'internal scratch']
  %s0 = inlined_call_operand.hbm [shape: f32[8,32], index: 0, kind: input, shape index: {}]
  %s1 = inlined_call_operand.hbm [shape: f32[32,128], index: 1, kind: input, shape index: {}]
  %s2 = inlined_call_operand.vmem [shape: f32[1,128], index: 2, kind: input, shape index: {}]
  %s3 = inlined_call_operand.hbm [shape: f32[128,128], index: 3, kind: input, shape index: {}]
  %s4 = inlined_call_operand.vmem [shape: f32[1,128], index: 4, kind: input, shape index: {}]
  %s5 = inlined_call_operand.hbm [shape: f32[8,128], index: 5, kind: output, shape index: {}]
  %s6 = sld [smem:[#allocation0]]
  $region42: #{tpu_custom_call.1} parent=0
    _
  %s8 = ssub.s32 1, %s6
  %s9 = scalar_select 0, %s8, %s6
  $region1: #{tpu_custom_call.1} parent=0
    #allocation2 [shape = 'u8[4096]{0}', space=vmem, size = 0x1000, scoped, tag = 'input window, operand 0, single buffered']
    #allocation3 [shape = 's32[1]{0}', space=sflag, size = 0x4, scoped, tag = 'scoped memory for tpu_custom_call.1']
    #allocation4 [shape = 's32[1]{0}', space=sflag, size = 0x4, scoped, tag = 'scoped memory for tpu_custom_call.1']
    #allocation5 [shape = 'u8[16384]{0}', space=vmem, size = 0x4000, scoped, tag = 'input window, operand 1, single buffered']
    #allocation6 [shape = 's32[1]{0}', space=sflag, size = 0x4, scoped, tag = 'scoped memory for tpu_custom_call.1']
    #allocation7 [shape = 'u8[65536]{0}', space=vmem, size = 0x10000, scoped, tag = 'input window, operand 3, single buffered']
    #allocation8 [shape = 'u8[4096]{0}', space=vmem, size = 0x1000, scoped, tag = 'output window, operand 0, single buffered']
    %10 = vsyncpa [#allocation3], 0
    %11 = vsyncpa [#allocation6], 0
    %12 = vsyncpa [#allocation4], 0
    // Predicated region
    $region2: #{tpu_custom_call.1} parent=1 // pred_check
      _
    $region3: #{tpu_custom_call.1} parent=1 // pred_check_branch
      %14 = sbr.rel (0) target = $region5
    $region4: #{tpu_custom_call.1} parent=1 // pred_region
      %16 = vsyncadd [#allocation3], 0
      %s18 = sshll.u32 %s0, 4
      %s19 = int_to_ptr.hbm [resolvable:$true] %s18
      %s20 = sshll.u32 [#allocation2], 4
      %s21 = int_to_ptr.vmem [resolvable:$true] %s20
      %23 = dma.hbm_to_vmem [thread:$0]  %s19, 128, %s21, [#allocation3]
    $region5: #{tpu_custom_call.1} parent=1 // pred_fallthru
      _
    // Predicated region
    $region6: #{tpu_custom_call.1} parent=1 // pred_check
      _
    $region7: #{tpu_custom_call.1} parent=1 // pred_check_branch
      %25 = sbr.rel (0) target = $region9
    $region8: #{tpu_custom_call.1} parent=1 // pred_region
      %27 = vsyncadd [#allocation6], 0
      %s28 = sshll.u32 %s1, 4
      %s29 = int_to_ptr.hbm [resolvable:$true] %s28
      %s30 = sshll.u32 [#allocation5], 4
      %s31 = int_to_ptr.vmem [resolvable:$true] %s30
      %36 = dma.hbm_to_vmem [thread:$0]  %s29, 512, %s31, [#allocation6], 128, 128, 8
    $region9: #{tpu_custom_call.1} parent=1 // pred_fallthru
      _
    // Predicated region
    $region10: #{tpu_custom_call.1} parent=1 // pred_check
      _
    $region11: #{tpu_custom_call.1} parent=1 // pred_check_branch
      %38 = sbr.rel (0) target = $region13
    $region12: #{tpu_custom_call.1} parent=1 // pred_region
      _
    $region13: #{tpu_custom_call.1} parent=1 // pred_fallthru
      _
    // Predicated region
    $region14: #{tpu_custom_call.1} parent=1 // pred_check
      _
    $region15: #{tpu_custom_call.1} parent=1 // pred_check_branch
      %40 = sbr.rel (0) target = $region17
    $region16: #{tpu_custom_call.1} parent=1 // pred_region
      %42 = vsyncadd [#allocation6], 0
      %s43 = sshll.u32 %s3, 4
      %s44 = int_to_ptr.hbm [resolvable:$true] %s43
      %s45 = sshll.u32 [#allocation7], 4
      %s46 = int_to_ptr.vmem [resolvable:$true] %s45
      %51 = dma.hbm_to_vmem [thread:$0]  %s44, 2048, %s46, [#allocation6], 128, 128, 8
    $region17: #{tpu_custom_call.1} parent=1 // pred_fallthru
      _
    // Predicated region
    $region18: #{tpu_custom_call.1} parent=1 // pred_check
      _
    $region19: #{tpu_custom_call.1} parent=1 // pred_check_branch
      %53 = sbr.rel (0) target = $region21
    $region20: #{tpu_custom_call.1} parent=1 // pred_region
      _
    $region21: #{tpu_custom_call.1} parent=1 // pred_fallthru
      _
    // Predicated region
    $region22: #{tpu_custom_call.1} parent=1 // pred_check
      _
    $region23: #{tpu_custom_call.1} parent=1 // pred_check_branch
      %55 = sbr.rel (0) target = $region25
    $region24: #{tpu_custom_call.1} parent=1 // pred_region
      %57 = dma.done [#allocation3], 128
    $region25: #{tpu_custom_call.1} parent=1 // pred_fallthru
      _
    // Predicated region
    $region26: #{tpu_custom_call.1} parent=1 // pred_check
      _
    $region27: #{tpu_custom_call.1} parent=1 // pred_check_branch
      %59 = sbr.rel (0) target = $region29
    $region28: #{tpu_custom_call.1} parent=1 // pred_region
      %61 = dma.done [#allocation6], 512
    $region29: #{tpu_custom_call.1} parent=1 // pred_fallthru
      _
    // Predicated region
    $region30: #{tpu_custom_call.1} parent=1 // pred_check
      _
    $region31: #{tpu_custom_call.1} parent=1 // pred_check_branch
      %63 = sbr.rel (0) target = $region33
    $region32: #{tpu_custom_call.1} parent=1 // pred_region
      %65 = dma.done [#allocation6], 2048
    $region33: #{tpu_custom_call.1} parent=1 // pred_fallthru
      _
    %v66 = vld [vmem:[#allocation2] sm:$0xff]
    %v67 = vld [vmem:[#allocation5] sm:$0xff]
    %v68 = vld [vmem:[#allocation5 + $0x8] sm:$0xff]
    %v69 = vld [vmem:[#allocation5 + $0x10] sm:$0xff]
    %v70 = vld [vmem:[#allocation5 + $0x18] sm:$0xff]
    %v71 = vld [vmem:[%s2] sm:$0x1]
    %v73 = vperm.slane %v71, 0
    %vm75 = vcmask 261120
    %v77 = vsel %vm75, %v66, 0
    %79 = vmatpush.msra.mxu0 0.0
    %80 = vmatpush.msra.mxu0 0.0
    %81 = vmatpush.msra.mxu0 0.0
    %82 = vmatpush.msra.mxu0 0.0
    %83 = vmatpush.msra.mxu0 0.0
    %84 = vmatpush.msra.mxu0 0.0
    %85 = vmatpush.msra.mxu0 0.0
    %86 = vmatpush.msra.mxu0 0.0
    %87 = vmatpush.msra.mxu0 0.0
    %88 = vmatpush.msra.mxu0 0.0
    %89 = vmatpush.msra.mxu0 0.0
    %90 = vmatpush.msra.mxu0 0.0
    %91 = vmatpush.msra.mxu0 %v70
    %92 = vmatpush.msra.mxu0 %v69
    %93 = vmatpush.msra.mxu0 %v68
    %94 = vmatpush.msra.mxu0 %v67
    %95 = vmatmul.f32.gmra.mxu0 %v77
    %v96 = vpop.f32.mrf.mxu0
    %v97 = vadd.f32 %v73, %v96
    %98 = vdwg.mxu0
    %v99 = vmax.f32 %v97, 0.0
    %v100 = vld [vmem:[#allocation7] sm:$0xff]
    %v101 = vld [vmem:[#allocation7 + $0x8] sm:$0xff]
    %v102 = vld [vmem:[#allocation7 + $0x10] sm:$0xff]
    %v103 = vld [vmem:[#allocation7 + $0x18] sm:$0xff]
    %v104 = vld [vmem:[#allocation7 + $0x20] sm:$0xff]
    %v105 = vld [vmem:[#allocation7 + $0x28] sm:$0xff]
    %v106 = vld [vmem:[#allocation7 + $0x30] sm:$0xff]
    %v107 = vld [vmem:[#allocation7 + $0x38] sm:$0xff]
    %v108 = vld [vmem:[#allocation7 + $0x40] sm:$0xff]
    %v109 = vld [vmem:[#allocation7 + $0x48] sm:$0xff]
    %v110 = vld [vmem:[#allocation7 + $0x50] sm:$0xff]
    %v111 = vld [vmem:[#allocation7 + $0x58] sm:$0xff]
    %v112 = vld [vmem:[#allocation7 + $0x60] sm:$0xff]
    %v113 = vld [vmem:[#allocation7 + $0x68] sm:$0xff]
    %v114 = vld [vmem:[#allocation7 + $0x70] sm:$0xff]
    %v115 = vld [vmem:[#allocation7 + $0x78] sm:$0xff]
    %v116 = vld [vmem:[%s4] sm:$0x1]
    %v118 = vperm.slane %v116, 0
    %120 = vmatpush.msra.mxu0 %v115
    %121 = vmatpush.msra.mxu0 %v114
    %122 = vmatpush.msra.mxu0 %v113
    %123 = vmatpush.msra.mxu0 %v112
    %124 = vmatpush.msra.mxu0 %v111
    %125 = vmatpush.msra.mxu0 %v110
    %126 = vmatpush.msra.mxu0 %v109
    %127 = vmatpush.msra.mxu0 %v108
    %128 = vmatpush.msra.mxu0 %v107
    %129 = vmatpush.msra.mxu0 %v106
    %130 = vmatpush.msra.mxu0 %v105
    %131 = vmatpush.msra.mxu0 %v104
    %132 = vmatpush.msra.mxu0 %v103
    %133 = vmatpush.msra.mxu0 %v102
    %134 = vmatpush.msra.mxu0 %v101
    %135 = vmatpush.msra.mxu0 %v100
    %136 = vmatmul.f32.gmra.mxu0 %v99
    %v137 = vpop.f32.mrf.mxu0
    %v138 = vadd.f32 %v118, %v137
    %139 = vdwg.mxu0
    %v140 = vmax.f32 %v138, 0.0
    %141 = vst [vmem:[#allocation8] sm:$0xff] %v140
    // Predicated region
    $region34: #{tpu_custom_call.1} parent=1 // pred_check
      _
    $region35: #{tpu_custom_call.1} parent=1 // pred_check_branch
      %143 = sbr.rel (0) target = $region37
    $region36: #{tpu_custom_call.1} parent=1 // pred_region
      %145 = vsyncadd [#allocation4], 0
      %s147 = sshll.u32 [#allocation8], 4
      %s148 = int_to_ptr.vmem [resolvable:$true] %s147
      %s149 = sshll.u32 %s5, 4
      %s150 = int_to_ptr.hbm [resolvable:$true] %s149
      %152 = dma.vmem_to_hbm [thread:$0]  %s148, 128, %s150, [#allocation4]
    $region37: #{tpu_custom_call.1} parent=1 // pred_fallthru
      _
    // Predicated region
    $region38: #{tpu_custom_call.1} parent=1 // pred_check
      _
    $region39: #{tpu_custom_call.1} parent=1 // pred_check_branch
      %154 = sbr.rel (0) target = $region41
    $region40: #{tpu_custom_call.1} parent=1 // pred_region
      %156 = dma.done [#allocation4], 128
    $region41: #{tpu_custom_call.1} parent=1 // pred_fallthru
      _
    %157 = vsyncpa [#allocation3], 1
    %158 = vsyncpa [#allocation6], 1
    %159 = vsyncpa [#allocation4], 1

</llo_original>
